<compile_context>
chip_gen: v7x
topology: tpu7x:2x2x1
jax: 0.10.0
libtpu: 0.0.40
codegen_flags: <defaults>
</compile_context>

<pallas_src>
import functools

import jax
import jax.numpy as jnp
from jax.experimental import pallas as pl
from jax.experimental.pallas import tpu as pltpu

_LANE = 128
_SUBLANE = 8
_B_TILE_CAP = 512          # review: 512-1024 row tiles amortize grid-step overhead


def _round_up(x, m):
    return (x + m - 1) // m * m


def _pick_batch_tile(batch):
    """Largest multiple-of-8 tile dividing the aligned batch (capped), leaving
    >= 2 grid steps when the batch allows it (v7x megacore sharding)."""
    b_al = _round_up(max(batch, 1), _SUBLANE)
    limit = min(_B_TILE_CAP, b_al if b_al < 2 * _SUBLANE else b_al // 2)
    tile = _SUBLANE
    for t in range(_SUBLANE, limit + 1, _SUBLANE):
        if b_al % t == 0:
            tile = t
    return tile, b_al


# ------------------------------- kernel -------------------------------------


def _fused_mlp_kernel(x_ref, w_ref, bgb_ref, o_ref, *,
                      num_layers, hidden_real, out_channels):
    """One batch tile through every layer; activations never leave VMEM.

    x_ref   : (B_TILE, IN_PAD) f32   narrow input tile (IN_PAD = round_up(in_ch, 8))
    w_ref   : (L, P, P)        bf16  packed, zero-padded (in, out) weights (resident)
    bgb_ref : (L, 8, P)        f32   row 0 = bias, row 1 = gamma, row 2 = beta
    o_ref   : (B_TILE, OUT)    f32   narrow (unpadded) output tile
    """
    h = x_ref[...].astype(jnp.float32)
    inv_h = jnp.float32(1.0 / float(hidden_real))

    # Static unroll: L is tiny here.  If hidden_layers grows, switch to
    # lax.fori_loop indexing w_ref[i] / bgb_ref[i] so only one layer's
    # temporaries stay live (review item).
    for i in range(num_layers):
        k = h.shape[1]                               # IN_PAD for i==0, P after
        w = w_ref[i][:k, :]                          # (k, P) bf16, static slice
        bgb = bgb_ref[i]                             # (8, P) f32
        # bf16 operands, f32 accumulation (MXU-native on v5e/v6e/v7x).
        y = jnp.dot(h.astype(jnp.bfloat16), w,
                    preferred_element_type=jnp.float32) + bgb[0:1, :]

        if i == num_layers - 1:
            h = jax.nn.sigmoid(y)                    # EUP
        else:
            y = jnp.maximum(y, 0.0)                  # ReLU; padded lanes stay 0
            # Single-pass LayerNorm stats over the *real* hidden width.
            # Padded lanes are exactly zero, so summing all P lanes and
            # dividing by hidden_real is exact.  rsqrt goes to the EUP.
            # (Single-pass var can cancel for wide/deep nets; fine at these
            # widths and masked by +eps.)
            s1 = jnp.sum(y, axis=-1, keepdims=True)
            s2 = jnp.sum(y * y, axis=-1, keepdims=True)
            mean = s1 * inv_h
            var = s2 * inv_h - mean * mean           # biased variance (torch)
            yhat = (y - mean) * jax.lax.rsqrt(var + 1e-5)
            h = yhat * bgb[1:2, :] + bgb[2:3, :]     # gamma/beta == 0 on padded lanes

    # Narrow store: only the real output lanes go back to HBM.
    o_ref[...] = h[:, :out_channels].astype(o_ref.dtype)


# ------------------------------ wrapper --------------------------------------


@functools.partial(jax.jit, static_argnames=("hidden_neurons", "out_channels"))
def base_mlp_forward(w_packed, bgb_packed, x, *, hidden_neurons, out_channels):
    """x: (batch, in_channels) f32 -> (batch, out_channels) f32."""
    num_layers, _, P = w_packed.shape
    batch, in_ch = x.shape

    in_pad = _round_up(in_ch, _SUBLANE)
    b_tile, b_al = _pick_batch_tile(batch)

    # Only pad rows to a sublane multiple and features to a multiple of 8 —
    # no 128-lane slab materialization in HBM (review item).
    if (b_al, in_pad) != (batch, in_ch):
        x_in = jnp.zeros((b_al, in_pad), x.dtype).at[:batch, :in_ch].set(x)
    else:
        x_in = x

    kernel = functools.partial(
        _fused_mlp_kernel,
        num_layers=int(num_layers),
        hidden_real=hidden_neurons,
        out_channels=out_channels,
    )

    cost = pl.CostEstimate(
        flops=2 * b_al * P * P * int(num_layers),
        transcendentals=b_al * (out_channels + (int(num_layers) - 1)),
        bytes_accessed=(x_in.size * x_in.dtype.itemsize
                        + w_packed.size * w_packed.dtype.itemsize
                        + bgb_packed.size * bgb_packed.dtype.itemsize
                        + b_al * out_channels * 4),
    )

    out = pl.pallas_call(
        kernel,
        out_shape=jax.ShapeDtypeStruct((b_al, out_channels), jnp.float32),
        grid=(b_al // b_tile,),
        in_specs=[
            pl.BlockSpec((b_tile, in_pad), lambda i: (i, 0)),             # x tile
            pl.BlockSpec((num_layers, P, P), lambda i: (0, 0, 0)),        # bf16 weights (resident)
            pl.BlockSpec((num_layers, 8, P), lambda i: (0, 0, 0)),        # bias/gamma/beta (resident)
        ],
        out_specs=pl.BlockSpec((b_tile, out_channels), lambda i: (i, 0)),  # narrow output
        compiler_params=pltpu.CompilerParams(
            dimension_semantics=("parallel",),
        ),
        cost_estimate=cost,
    )(x_in, w_packed, bgb_packed)

    return out[:batch] if b_al != batch else out


# --------------------------- params / references ------------------------------


def init_base_mlp_params(key, in_channels, out_channels, hidden_layers, hidden_neurons):
    """Deterministic init mirroring nn.Linear / nn.LayerNorm, packed & padded.

    Returns:
      w_packed   : (L, P, P) bf16  zero-padded (in, out)-layout weights
      bgb_packed : (L, 8, P) f32   row 0 = bias, row 1 = gamma, row 2 = beta
    """
    P = _round_up(max(in_channels, out_channels, hidden_neurons), _LANE)
    w_packed = jnp.zeros((hidden_layers, P, P), jnp.float32)
    bgb_packed = jnp.zeros((hidden_layers, 8, P), jnp.float32)

    for i in range(hidden_layers):
        in_i = in_channels if i == 0 else hidden_neurons
        out_i = out_channels if i == hidden_layers - 1 else hidden_neurons
        key, kw, kb = jax.random.split(key, 3)
        bound = 1.0 / (in_i ** 0.5)      # torch nn.Linear init: U(-1/sqrt(in), 1/sqrt(in))
        w = jax.random.uniform(kw, (in_i, out_i), jnp.float32, -bound, bound)
        b = jax.random.uniform(kb, (out_i,), jnp.float32, -bound, bound)
        w_packed = w_packed.at[i, :in_i, :out_i].set(w)
        bgb_packed = bgb_packed.at[i, 0, :out_i].set(b)
        if i != hidden_layers - 1:
            bgb_packed = bgb_packed.at[i, 1, :out_i].set(1.0)   # gamma = 1, beta = 0
    # Store weights in bf16: MXU-native operand dtype, halves resident VMEM +
    # one-time DMA.  These bf16 values ARE the model's weights.
    return w_packed.astype(jnp.bfloat16), bgb_packed


def _kernel_equiv_reference(w_packed, bgb_packed, x_in, hidden_neurons, num_layers):
    """Pure-JAX mirror of the kernel's exact numerics (bf16 matmul operands,
    f32 accumulation, single-pass LayerNorm over padded lanes)."""
    h = x_in.astype(jnp.float32)
    inv_h = 1.0 / float(hidden_neurons)
    for i in range(num_layers):
        k = h.shape[1]
        y = jnp.dot(h.astype(jnp.bfloat16), w_packed[i, :k, :],
                    preferred_element_type=jnp.float32) + bgb_packed[i, 0:1, :]
        if i == num_layers - 1:
            h = jax.nn.sigmoid(y)
        else:
            y = jnp.maximum(y, 0.0)
            s1 = jnp.sum(y, axis=-1, keepdims=True)
            s2 = jnp.sum(y * y, axis=-1, keepdims=True)
            mean = s1 * inv_h
            var = s2 * inv_h - mean * mean
            h = (y - mean) * jax.lax.rsqrt(var + 1e-5) * bgb_packed[i, 1:2, :] \
                + bgb_packed[i, 2:3, :]
    return h


def _module_reference(w_packed, bgb_packed, x, in_channels, out_channels,
                      hidden_layers, hidden_neurons):
    """Pure-f32 reference identical to the PyTorch BaseMLP forward (weights are
    the stored bf16 values upcast to f32)."""
    h = x
    for i in range(hidden_layers):
        in_i = in_channels if i == 0 else hidden_neurons
        out_i = out_channels if i == hidden_layers - 1 else hidden_neurons
        w = w_packed[i, :in_i, :out_i].astype(jnp.float32)
        b = bgb_packed[i, 0, :out_i]
        y = h @ w + b
        if i == hidden_layers - 1:
            h = jax.nn.sigmoid(y)
        else:
            y = jnp.maximum(y, 0.0)
            mean = jnp.mean(y, axis=-1, keepdims=True)
            var = jnp.mean((y - mean) ** 2, axis=-1, keepdims=True)
            h = (y - mean) / jnp.sqrt(var + 1e-5) * bgb_packed[i, 1, :out_i] \
                + bgb_packed[i, 2, :out_i]
    return h


# --------------------------------- main ---------------------------------------

if __name__ == "__main__":
    key = jax.random.PRNGKey(0)
    k_params, k_x = jax.random.split(key)

    batch = 8
    in_channels = 16
    out_channels = 8
    hidden_layers = 3
    hidden_neurons = 32

    w_packed, bgb_packed = init_base_mlp_params(
        k_params, in_channels, out_channels, hidden_layers, hidden_neurons
    )
    x = jax.random.normal(k_x, (batch, in_channels), jnp.float32)

    out = base_mlp_forward(
        w_packed, bgb_packed, x,
        hidden_neurons=hidden_neurons, out_channels=out_channels,
    )
    out = jax.block_until_ready(out)

    # Tight check vs an exact mirror of the kernel's numerics.
    in_pad = _round_up(in_channels, _SUBLANE)
    x_in = jnp.zeros((batch, in_pad), x.dtype).at[:, :in_channels].set(x)
    ref_exact = _kernel_equiv_reference(
        w_packed, bgb_packed, x_in, hidden_neurons, hidden_layers
    )[:, :out_channels]

    # Looser check vs f32 PyTorch-module semantics (only deviation: the
    # in-kernel bf16 cast of activations before each MXU matmul).
    ref_f32 = _module_reference(
        w_packed, bgb_packed, x, in_channels, out_channels,
        hidden_layers, hidden_neurons,
    )

    assert out.shape == (batch, out_channels)
    assert bool(jnp.all(jnp.isfinite(out)))
    assert bool(jnp.all((out >= 0.0) & (out <= 1.0)))                  # sigmoid range
    assert bool(jnp.allclose(out, ref_exact, rtol=1e-4, atol=1e-5))    # kernel numerics
    assert bool(jnp.allclose(out, ref_f32, rtol=2e-2, atol=2e-2))      # module semantics

    print("KERNEL_OK")
</pallas_src>

<mosaic_0001>
module attributes {stable_mosaic.version = 11 : i64} {
  func.func @_fused_mlp_kernel(%arg0: i32, %arg1: memref<8x16xf32, #tpu.memory_space<vmem>>, %arg2: memref<3x128x128xbf16, #tpu.memory_space<vmem>>, %arg3: memref<3x8x128xf32, #tpu.memory_space<vmem>>, %arg4: memref<8x8xf32, #tpu.memory_space<vmem>>) attributes {dimension_semantics = [#tpu.dimension_semantics<parallel>], iteration_bounds = array<i64: 1>, scalar_prefetch = 0 : i64, scratch_operands = 0 : i64, tpu.core_type = #tpu.core_type<tc>, window_params = [{transform_indices = @transform_0, window_bounds = array<i64: 8, 16>}, {pipeline_mode = #tpu.pipeline_mode<synchronous>, transform_indices = @transform_1, window_bounds = array<i64: 3, 128, 128>}, {pipeline_mode = #tpu.pipeline_mode<synchronous>, transform_indices = @transform_2, window_bounds = array<i64: 3, 8, 128>}, {transform_indices = @transform_3, window_bounds = array<i64: 8, 8>}]} {
    %c0 = arith.constant 0 : index
    %c0_0 = arith.constant 0 : index
    %0 = vector.load %arg1[%c0, %c0_0] : memref<8x16xf32, #tpu.memory_space<vmem>>, vector<8x16xf32>
    %c0_1 = arith.constant 0 : index
    %c0_2 = arith.constant 0 : index
    %c0_3 = arith.constant 0 : index
    %1 = vector.load %arg2[%c0_1, %c0_2, %c0_3] : memref<3x128x128xbf16, #tpu.memory_space<vmem>>, vector<1x128x128xbf16>
    %2 = vector.shape_cast %1 : vector<1x128x128xbf16> to vector<128x128xbf16>
    %3 = vector.extract_strided_slice %2 {offsets = [0, 0], sizes = [16, 128], strides = [1, 1]} : vector<128x128xbf16> to vector<16x128xbf16>
    %c0_4 = arith.constant 0 : index
    %c0_5 = arith.constant 0 : index
    %c0_6 = arith.constant 0 : index
    %4 = vector.load %arg3[%c0_4, %c0_5, %c0_6] : memref<3x8x128xf32, #tpu.memory_space<vmem>>, vector<1x8x128xf32>
    %5 = vector.shape_cast %4 : vector<1x8x128xf32> to vector<8x128xf32>
    %6 = arith.truncf %0 : vector<8x16xf32> to vector<8x16xbf16>
    %cst = arith.constant dense<0.000000e+00> : vector<8x128xf32>
    %7 = tpu.matmul %6, %3, %cst {dimension_numbers = #tpu.dot_dimension_numbers<[1], [0], [0], [1], [0, 0, 1, 1], [], []>} : vector<8x16xbf16>, vector<16x128xbf16>, vector<8x128xf32> -> vector<8x128xf32>
    %8 = vector.extract_strided_slice %5 {offsets = [0, 0], sizes = [1, 128], strides = [1, 1]} : vector<8x128xf32> to vector<1x128xf32>
    %9 = vector.broadcast %8 : vector<1x128xf32> to vector<8x128xf32>
    %10 = arith.addf %7, %9 : vector<8x128xf32>
    %cst_7 = arith.constant 0.000000e+00 : f32
    %11 = vector.broadcast %cst_7 : f32 to vector<8x128xf32>
    %12 = arith.maximumf %10, %11 : vector<8x128xf32>
    %cst_8 = arith.constant dense<0.000000e+00> : vector<8xf32>
    %13 = vector.multi_reduction <add>, %12, %cst_8 [1] : vector<8x128xf32> to vector<8xf32>
    %14 = vector.shape_cast %13 : vector<8xf32> to vector<8x1xf32>
    %15 = arith.mulf %12, %12 : vector<8x128xf32>
    %cst_9 = arith.constant dense<0.000000e+00> : vector<8xf32>
    %16 = vector.multi_reduction <add>, %15, %cst_9 [1] : vector<8x128xf32> to vector<8xf32>
    %17 = vector.shape_cast %16 : vector<8xf32> to vector<8x1xf32>
    %cst_10 = arith.constant 3.125000e-02 : f32
    %18 = vector.broadcast %cst_10 : f32 to vector<8x1xf32>
    %19 = arith.mulf %14, %18 : vector<8x1xf32>
    %cst_11 = arith.constant 3.125000e-02 : f32
    %20 = vector.broadcast %cst_11 : f32 to vector<8x1xf32>
    %21 = arith.mulf %17, %20 : vector<8x1xf32>
    %22 = arith.mulf %19, %19 : vector<8x1xf32>
    %23 = arith.subf %21, %22 : vector<8x1xf32>
    %24 = vector.broadcast %19 : vector<8x1xf32> to vector<8x128xf32>
    %25 = arith.subf %12, %24 : vector<8x128xf32>
    %cst_12 = arith.constant 9.99999974E-6 : f32
    %26 = vector.broadcast %cst_12 : f32 to vector<8x1xf32>
    %27 = arith.addf %23, %26 : vector<8x1xf32>
    %28 = math.rsqrt %27 : vector<8x1xf32>
    %29 = vector.broadcast %28 : vector<8x1xf32> to vector<8x128xf32>
    %30 = arith.mulf %25, %29 : vector<8x128xf32>
    %31 = vector.extract_strided_slice %5 {offsets = [1, 0], sizes = [1, 128], strides = [1, 1]} : vector<8x128xf32> to vector<1x128xf32>
    %32 = vector.broadcast %31 : vector<1x128xf32> to vector<8x128xf32>
    %33 = arith.mulf %30, %32 : vector<8x128xf32>
    %34 = vector.extract_strided_slice %5 {offsets = [2, 0], sizes = [1, 128], strides = [1, 1]} : vector<8x128xf32> to vector<1x128xf32>
    %35 = vector.broadcast %34 : vector<1x128xf32> to vector<8x128xf32>
    %36 = arith.addf %33, %35 : vector<8x128xf32>
    %c1 = arith.constant 1 : index
    %c0_13 = arith.constant 0 : index
    %c0_14 = arith.constant 0 : index
    %37 = vector.load %arg2[%c1, %c0_13, %c0_14] : memref<3x128x128xbf16, #tpu.memory_space<vmem>>, vector<1x128x128xbf16>
    %38 = vector.shape_cast %37 : vector<1x128x128xbf16> to vector<128x128xbf16>
    %c1_15 = arith.constant 1 : index
    %c0_16 = arith.constant 0 : index
    %c0_17 = arith.constant 0 : index
    %39 = vector.load %arg3[%c1_15, %c0_16, %c0_17] : memref<3x8x128xf32, #tpu.memory_space<vmem>>, vector<1x8x128xf32>
    %40 = vector.shape_cast %39 : vector<1x8x128xf32> to vector<8x128xf32>
    %41 = arith.truncf %36 : vector<8x128xf32> to vector<8x128xbf16>
    %cst_18 = arith.constant dense<0.000000e+00> : vector<8x128xf32>
    %42 = tpu.matmul %41, %38, %cst_18 {dimension_numbers = #tpu.dot_dimension_numbers<[1], [0], [0], [1], [0, 0, 1, 1], [], []>} : vector<8x128xbf16>, vector<128x128xbf16>, vector<8x128xf32> -> vector<8x128xf32>
    %43 = vector.extract_strided_slice %40 {offsets = [0, 0], sizes = [1, 128], strides = [1, 1]} : vector<8x128xf32> to vector<1x128xf32>
    %44 = vector.broadcast %43 : vector<1x128xf32> to vector<8x128xf32>
    %45 = arith.addf %42, %44 : vector<8x128xf32>
    %cst_19 = arith.constant 0.000000e+00 : f32
    %46 = vector.broadcast %cst_19 : f32 to vector<8x128xf32>
    %47 = arith.maximumf %45, %46 : vector<8x128xf32>
    %cst_20 = arith.constant dense<0.000000e+00> : vector<8xf32>
    %48 = vector.multi_reduction <add>, %47, %cst_20 [1] : vector<8x128xf32> to vector<8xf32>
    %49 = vector.shape_cast %48 : vector<8xf32> to vector<8x1xf32>
    %50 = arith.mulf %47, %47 : vector<8x128xf32>
    %cst_21 = arith.constant dense<0.000000e+00> : vector<8xf32>
    %51 = vector.multi_reduction <add>, %50, %cst_21 [1] : vector<8x128xf32> to vector<8xf32>
    %52 = vector.shape_cast %51 : vector<8xf32> to vector<8x1xf32>
    %cst_22 = arith.constant 3.125000e-02 : f32
    %53 = vector.broadcast %cst_22 : f32 to vector<8x1xf32>
    %54 = arith.mulf %49, %53 : vector<8x1xf32>
    %cst_23 = arith.constant 3.125000e-02 : f32
    %55 = vector.broadcast %cst_23 : f32 to vector<8x1xf32>
    %56 = arith.mulf %52, %55 : vector<8x1xf32>
    %57 = arith.mulf %54, %54 : vector<8x1xf32>
    %58 = arith.subf %56, %57 : vector<8x1xf32>
    %59 = vector.broadcast %54 : vector<8x1xf32> to vector<8x128xf32>
    %60 = arith.subf %47, %59 : vector<8x128xf32>
    %cst_24 = arith.constant 9.99999974E-6 : f32
    %61 = vector.broadcast %cst_24 : f32 to vector<8x1xf32>
    %62 = arith.addf %58, %61 : vector<8x1xf32>
    %63 = math.rsqrt %62 : vector<8x1xf32>
    %64 = vector.broadcast %63 : vector<8x1xf32> to vector<8x128xf32>
    %65 = arith.mulf %60, %64 : vector<8x128xf32>
    %66 = vector.extract_strided_slice %40 {offsets = [1, 0], sizes = [1, 128], strides = [1, 1]} : vector<8x128xf32> to vector<1x128xf32>
    %67 = vector.broadcast %66 : vector<1x128xf32> to vector<8x128xf32>
    %68 = arith.mulf %65, %67 : vector<8x128xf32>
    %69 = vector.extract_strided_slice %40 {offsets = [2, 0], sizes = [1, 128], strides = [1, 1]} : vector<8x128xf32> to vector<1x128xf32>
    %70 = vector.broadcast %69 : vector<1x128xf32> to vector<8x128xf32>
    %71 = arith.addf %68, %70 : vector<8x128xf32>
    %c2 = arith.constant 2 : index
    %c0_25 = arith.constant 0 : index
    %c0_26 = arith.constant 0 : index
    %72 = vector.load %arg2[%c2, %c0_25, %c0_26] : memref<3x128x128xbf16, #tpu.memory_space<vmem>>, vector<1x128x128xbf16>
    %73 = vector.shape_cast %72 : vector<1x128x128xbf16> to vector<128x128xbf16>
    %c2_27 = arith.constant 2 : index
    %c0_28 = arith.constant 0 : index
    %c0_29 = arith.constant 0 : index
    %74 = vector.load %arg3[%c2_27, %c0_28, %c0_29] : memref<3x8x128xf32, #tpu.memory_space<vmem>>, vector<1x8x128xf32>
    %75 = vector.shape_cast %74 : vector<1x8x128xf32> to vector<8x128xf32>
    %76 = arith.truncf %71 : vector<8x128xf32> to vector<8x128xbf16>
    %cst_30 = arith.constant dense<0.000000e+00> : vector<8x128xf32>
    %77 = tpu.matmul %76, %73, %cst_30 {dimension_numbers = #tpu.dot_dimension_numbers<[1], [0], [0], [1], [0, 0, 1, 1], [], []>} : vector<8x128xbf16>, vector<128x128xbf16>, vector<8x128xf32> -> vector<8x128xf32>
    %78 = vector.extract_strided_slice %75 {offsets = [0, 0], sizes = [1, 128], strides = [1, 1]} : vector<8x128xf32> to vector<1x128xf32>
    %79 = vector.broadcast %78 : vector<1x128xf32> to vector<8x128xf32>
    %80 = arith.addf %77, %79 : vector<8x128xf32>
    %81 = arith.negf %80 : vector<8x128xf32>
    %82 = math.exp %81 : vector<8x128xf32>
    %cst_31 = arith.constant 1.000000e+00 : f32
    %83 = vector.broadcast %cst_31 : f32 to vector<8x128xf32>
    %84 = arith.addf %83, %82 : vector<8x128xf32>
    %85 = arith.divf %83, %84 : vector<8x128xf32>
    %86 = vector.extract_strided_slice %85 {offsets = [0, 0], sizes = [8, 8], strides = [1, 1]} : vector<8x128xf32> to vector<8x8xf32>
    %c0_32 = arith.constant 0 : index
    %c0_33 = arith.constant 0 : index
    %87 = vector.load %arg4[%c0_32, %c0_33] : memref<8x8xf32, #tpu.memory_space<vmem>>, vector<8x8xf32>
    tpu.vector_store %arg4[%c0_32, %c0_33], %86 {strides = array<i32>} : memref<8x8xf32, #tpu.memory_space<vmem>>, vector<8x8xf32>,
    return
  }
  func.func @transform_0(%arg0: i32) -> (i32, i32) {
    %c0_i32 = arith.constant 0 : i32
    %c0_i32_0 = arith.constant 0 : i32
    return %arg0, %c0_i32 : i32, i32
  }
  func.func @transform_1(%arg0: i32) -> (i32, i32, i32) {
    %c0_i32 = arith.constant 0 : i32
    %c0_i32_0 = arith.constant 0 : i32
    %c0_i32_1 = arith.constant 0 : i32
    %c0_i32_2 = arith.constant 0 : i32
    return %c0_i32, %c0_i32_0, %c0_i32_1 : i32, i32, i32
  }
  func.func @transform_2(%arg0: i32) -> (i32, i32, i32) {
    %c0_i32 = arith.constant 0 : i32
    %c0_i32_0 = arith.constant 0 : i32
    %c0_i32_1 = arith.constant 0 : i32
    %c0_i32_2 = arith.constant 0 : i32
    return %c0_i32, %c0_i32_0, %c0_i32_1 : i32, i32, i32
  }
  func.func @transform_3(%arg0: i32) -> (i32, i32) {
    %c0_i32 = arith.constant 0 : i32
    %c0_i32_0 = arith.constant 0 : i32
    return %arg0, %c0_i32 : i32, i32
  }
}

</mosaic_0001>

<llo_original>
// kernel: base_mlp_forward.1
$region0: #{base_mlp_forward.1}
  #allocation0 [shape = 'u32[]', space=smem, size = 0x4, offset = 0x4, fixed_abs, tag = 'smem constant byte address 0x4 - core index']
  #allocation1 [shape = 'u32[144,128]{1,0:T(1,128)}', space=vmem, size = 0x12000, scoped, tag = 'internal scratch']
  %s0 = inlined_call_operand.hbm [shape: f32[8,16], index: 0, kind: input, shape index: {}]
  %s1 = inlined_call_operand.hbm [shape: bf16[3,128,128], index: 1, kind: input, shape index: {}]
  %s2 = inlined_call_operand.hbm [shape: f32[3,8,128], index: 2, kind: input, shape index: {}]
  %s3 = inlined_call_operand.hbm [shape: f32[8,8], index: 3, kind: output, shape index: {}]
  %s4 = sld [smem:[#allocation0]]
  $region34: #{base_mlp_forward.1} parent=0
    _
  %s6 = ssub.s32 1, %s4
  %s7 = scalar_select 0, %s6, %s4
  $region1: #{base_mlp_forward.1} parent=0
    #allocation2 [shape = 'u8[4096]{0}', space=vmem, size = 0x1000, scoped, tag = 'input window, operand 0, single buffered']
    #allocation3 [shape = 's32[1]{0}', space=sflag, size = 0x4, scoped, tag = 'scoped memory for base_mlp_forward.1']
    #allocation4 [shape = 's32[1]{0}', space=sflag, size = 0x4, scoped, tag = 'scoped memory for base_mlp_forward.1']
    #allocation5 [shape = 'u8[98304]{0}', space=vmem, size = 0x18000, scoped, tag = 'input window, operand 1, single buffered']
    #allocation6 [shape = 's32[1]{0}', space=sflag, size = 0x4, scoped, tag = 'scoped memory for base_mlp_forward.1']
    #allocation7 [shape = 'u8[12288]{0}', space=vmem, size = 0x3000, scoped, tag = 'input window, operand 2, single buffered']
    #allocation8 [shape = 'u8[4096]{0}', space=vmem, size = 0x1000, scoped, tag = 'output window, operand 0, single buffered']
    %8 = vsyncpa [#allocation3], 0
    %9 = vsyncpa [#allocation6], 0
    %10 = vsyncpa [#allocation4], 0
    // Predicated region
    $region2: #{base_mlp_forward.1} parent=1 // pred_check
      _
    $region3: #{base_mlp_forward.1} parent=1 // pred_check_branch
      %12 = sbr.rel (0) target = $region5
    $region4: #{base_mlp_forward.1} parent=1 // pred_region
      %s14 = ssub.s32 128, 128
      %15 = vsyncadd [#allocation3], %s14
      %s17 = sshll.u32 [#allocation2], 4
      %s18 = int_to_ptr.vmem [resolvable:$true] %s17
      %20 = dma.hbm_to_vmem [thread:$0]  %s0, 128, %s18, [#allocation3]
    $region5: #{base_mlp_forward.1} parent=1 // pred_fallthru
      _
    // Predicated region
    $region6: #{base_mlp_forward.1} parent=1 // pred_check
      _
    $region7: #{base_mlp_forward.1} parent=1 // pred_check_branch
      %22 = sbr.rel (0) target = $region9
    $region8: #{base_mlp_forward.1} parent=1 // pred_region
      %s24 = ssub.s32 3072, 3072
      %25 = vsyncadd [#allocation6], %s24
      %s26 = sshll.u32 [#allocation5], 4
      %s27 = int_to_ptr.vmem [resolvable:$true] %s26
      %32 = dma.hbm_to_vmem [thread:$0]  %s1, 3072, %s27, [#allocation6], 64, 64, 4
    $region9: #{base_mlp_forward.1} parent=1 // pred_fallthru
      _
    // Predicated region
    $region10: #{base_mlp_forward.1} parent=1 // pred_check
      _
    $region11: #{base_mlp_forward.1} parent=1 // pred_check_branch
      %34 = sbr.rel (0) target = $region13
    $region12: #{base_mlp_forward.1} parent=1 // pred_region
      %s36 = ssub.s32 384, 384
      %37 = vsyncadd [#allocation6], %s36
      %s38 = sshll.u32 [#allocation7], 4
      %s39 = int_to_ptr.vmem [resolvable:$true] %s38
      %44 = dma.hbm_to_vmem [thread:$0]  %s2, 384, %s39, [#allocation6], 128, 128, 8
    $region13: #{base_mlp_forward.1} parent=1 // pred_fallthru
      _
    // Predicated region
    $region14: #{base_mlp_forward.1} parent=1 // pred_check
      _
    $region15: #{base_mlp_forward.1} parent=1 // pred_check_branch
      %46 = sbr.rel (0) target = $region17
    $region16: #{base_mlp_forward.1} parent=1 // pred_region
      %47 = dma.done [#allocation3], 128
    $region17: #{base_mlp_forward.1} parent=1 // pred_fallthru
      _
    // Predicated region
    $region18: #{base_mlp_forward.1} parent=1 // pred_check
      _
    $region19: #{base_mlp_forward.1} parent=1 // pred_check_branch
      %49 = sbr.rel (0) target = $region21
    $region20: #{base_mlp_forward.1} parent=1 // pred_region
      %50 = dma.done [#allocation6], 3072
    $region21: #{base_mlp_forward.1} parent=1 // pred_fallthru
      _
    // Predicated region
    $region22: #{base_mlp_forward.1} parent=1 // pred_check
      _
    $region23: #{base_mlp_forward.1} parent=1 // pred_check_branch
      %52 = sbr.rel (0) target = $region25
    $region24: #{base_mlp_forward.1} parent=1 // pred_region
      %53 = dma.done [#allocation6], 384
    $region25: #{base_mlp_forward.1} parent=1 // pred_fallthru
      _
    %v55 = vld [vmem:[#allocation2] sm:$0xff]
    %v56 = vld [vmem:[#allocation5] sm:$0xf]
    %v57 = vld [vmem:[#allocation5 + $0x4] sm:$0xf]
    %v58 = vld [vmem:[#allocation7] sm:$0xff]
    %v59 = vpack.c.bf16 %v55, %v55
    %v60 = vlaneseq
    %v61 = vshrl.u32 %v60, 7
    %v62 = vsub.s32 0, %v61
    %v63 = vrot.slane %v58, %v62
    %v66 = vunpack.c.l.b16 %v56
    %v67 = vunpack.c.l.b16 %v57
    %v68 = vpack.c.b16 %v67, %v66
    %vm70 = vcmask 130048
    %v72 = vsel %vm70, %v59, 0
    %74 = vmatprep.subr.bf16.mxu0 0
    %75 = vmatpush1.bf16.msra.mxu0 %v68
    %76 = vmatprep.subr.bf16.mxu0 0
    %77 = vmatpush1.bf16.msra.mxu0 0
    %78 = vmatprep.subr.bf16.mxu0 0
    %79 = vmatpush1.bf16.msra.mxu0 0
    %80 = vmatprep.subr.bf16.mxu0 0
    %81 = vmatpush1.bf16.msra.mxu0 0
    %82 = vmatprep.subr.bf16.mxu0 0
    %83 = vmatpush1.bf16.msra.mxu0 0
    %84 = vmatprep.subr.bf16.mxu0 0
    %85 = vmatpush1.bf16.msra.mxu0 0
    %86 = vmatprep.subr.bf16.mxu0 0
    %87 = vmatpush1.bf16.msra.mxu0 0
    %88 = vmatprep.subr.bf16.mxu0 0
    %89 = vmatpush1.bf16.msra.mxu0 0
    %90 = vmatprep.subr.bf16.mxu0 0
    %91 = vmatpush1.bf16.msra.mxu0 0
    %92 = vmatprep.subr.bf16.mxu0 0
    %93 = vmatpush1.bf16.msra.mxu0 0
    %94 = vmatprep.subr.bf16.mxu0 0
    %95 = vmatpush1.bf16.msra.mxu0 0
    %96 = vmatprep.subr.bf16.mxu0 0
    %97 = vmatpush1.bf16.msra.mxu0 0
    %98 = vmatprep.subr.bf16.mxu0 0
    %99 = vmatpush1.bf16.msra.mxu0 0
    %100 = vmatprep.subr.bf16.mxu0 0
    %101 = vmatpush1.bf16.msra.mxu0 0
    %102 = vmatprep.subr.bf16.mxu0 0
    %103 = vmatpush1.bf16.msra.mxu0 0
    %104 = vmatprep.subr.bf16.mxu0 0
    %105 = vmatpush1.bf16.msra.mxu0 0
    %106 = vmatprep.mubr.bf16.mxu0 0
    %107 = vmatmul.mubr.bf16.gmra.mrb[0].mxu0 %v72
    %v108 = vpop.f32.mrb[0].mxu0
    %v109 = vadd.f32 %v63, %v108
    %v110 = vpop.f32.mrb[0].mxu0
    %v111 = vpop.f32.mrb[0].mxu0
    %v112 = vpop.f32.mrb[0].mxu0
    %113 = vdwg.mxu0
    %v114 = vmax.f32 %v109, 0.0
    %115 = vadd.xlane.f32.xlu0 %v114
    %v116 = vpop.xlane.xlu0 %115
    %v117 = vmul.f32 %v114, %v114
    %118 = vadd.xlane.f32.xlu0 %v117
    %v119 = vpop.xlane.xlu0 %118
    %v120 = vmul.f32 %v116, 0.03125
    %v121 = vmul.f32 %v119, 0.03125
    %v122 = vmul.f32 %v120, %v120
    %v123 = vsub.f32 %v121, %v122
    %v124 = vsub.f32 %v114, %v120
    %v125 = vadd.f32 %v123, 1e-05
    %v126 = vrsqrt.pop %v125
    %v127 = vmul.f32 %v124, %v126
    %v128 = vlaneseq
    %v129 = vshrl.u32 %v128, 7
    %v130 = vsub.s32 1, %v129
    %v131 = vrot.slane %v58, %v130
    %v132 = vmul.f32 %v127, %v131
    %v133 = vlaneseq
    %v134 = vshrl.u32 %v133, 7
    %v135 = vsub.s32 2, %v134
    %v136 = vrot.slane %v58, %v135
    %v137 = vadd.f32 %v132, %v136
    %s138 = scalar_lea.vmem [#allocation5], 64
    %v139 = vld [vmem:[%s138] sm:$0xf]
    %v140 = vld [vmem:[%s138 + $0x4] sm:$0xf]
    %v141 = vld [vmem:[%s138 + $0x8] sm:$0xf]
    %v142 = vld [vmem:[%s138 + $0xc] sm:$0xf]
    %v143 = vld [vmem:[%s138 + $0x10] sm:$0xf]
    %v144 = vld [vmem:[%s138 + $0x14] sm:$0xf]
    %v145 = vld [vmem:[%s138 + $0x18] sm:$0xf]
    %v146 = vld [vmem:[%s138 + $0x1c] sm:$0xf]
    %v147 = vld [vmem:[%s138 + $0x20] sm:$0xf]
    %v148 = vld [vmem:[%s138 + $0x24] sm:$0xf]
    %v149 = vld [vmem:[%s138 + $0x28] sm:$0xf]
    %v150 = vld [vmem:[%s138 + $0x2c] sm:$0xf]
    %v151 = vld [vmem:[%s138 + $0x30] sm:$0xf]
    %v152 = vld [vmem:[%s138 + $0x34] sm:$0xf]
    %v153 = vld [vmem:[%s138 + $0x38] sm:$0xf]
    %v154 = vld [vmem:[%s138 + $0x3c] sm:$0xf]
    %s155 = scalar_lea.vmem [#allocation7], 8
    %v156 = vld [vmem:[%s155] sm:$0xff]
    %v157 = vpack.c.bf16 %v137, %v137
    %v158 = vlaneseq
    %v159 = vshrl.u32 %v158, 7
    %v160 = vsub.s32 0, %v159
    %v161 = vrot.slane %v156, %v160
    %v178 = vunpack.c.l.b16 %v139
    %v179 = vunpack.c.l.b16 %v140
    %v180 = vunpack.c.l.b16 %v141
    %v181 = vunpack.c.l.b16 %v142
    %v182 = vunpack.c.l.b16 %v143
    %v183 = vunpack.c.l.b16 %v144
    %v184 = vunpack.c.l.b16 %v145
    %v185 = vunpack.c.l.b16 %v146
    %v186 = vunpack.c.l.b16 %v147
    %v187 = vunpack.c.l.b16 %v148
    %v188 = vunpack.c.l.b16 %v149
    %v189 = vunpack.c.l.b16 %v150
    %v190 = vunpack.c.l.b16 %v151
    %v191 = vunpack.c.l.b16 %v152
    %v192 = vunpack.c.l.b16 %v153
    %v193 = vunpack.c.l.b16 %v154
    %v194 = vpack.c.b16 %v179, %v178
    %v195 = vpack.c.b16 %v181, %v180
    %v196 = vpack.c.b16 %v183, %v182
    %v197 = vpack.c.b16 %v185, %v184
    %v198 = vpack.c.b16 %v187, %v186
    %v199 = vpack.c.b16 %v189, %v188
    %v200 = vpack.c.b16 %v191, %v190
    %v201 = vpack.c.b16 %v193, %v192
    %210 = vmatprep.subr.bf16.mxu0 0
    %211 = vmatpush1.bf16.msra.mxu0 %v194
    %212 = vmatprep.subr.bf16.mxu0 0
    %213 = vmatpush1.bf16.msra.mxu0 %v195
    %214 = vmatprep.subr.bf16.mxu0 0
    %215 = vmatpush1.bf16.msra.mxu0 %v196
    %216 = vmatprep.subr.bf16.mxu0 0
    %217 = vmatpush1.bf16.msra.mxu0 %v197
    %218 = vmatprep.subr.bf16.mxu0 0
    %219 = vmatpush1.bf16.msra.mxu0 %v198
    %220 = vmatprep.subr.bf16.mxu0 0
    %221 = vmatpush1.bf16.msra.mxu0 %v199
    %222 = vmatprep.subr.bf16.mxu0 0
    %223 = vmatpush1.bf16.msra.mxu0 %v200
    %224 = vmatprep.subr.bf16.mxu0 0
    %225 = vmatpush1.bf16.msra.mxu0 %v201
    %226 = vmatprep.subr.bf16.mxu0 0
    %227 = vmatpush1.bf16.msra.mxu0 0
    %228 = vmatprep.subr.bf16.mxu0 0
    %229 = vmatpush1.bf16.msra.mxu0 0
    %230 = vmatprep.subr.bf16.mxu0 0
    %231 = vmatpush1.bf16.msra.mxu0 0
    %232 = vmatprep.subr.bf16.mxu0 0
    %233 = vmatpush1.bf16.msra.mxu0 0
    %234 = vmatprep.subr.bf16.mxu0 0
    %235 = vmatpush1.bf16.msra.mxu0 0
    %236 = vmatprep.subr.bf16.mxu0 0
    %237 = vmatpush1.bf16.msra.mxu0 0
    %238 = vmatprep.subr.bf16.mxu0 0
    %239 = vmatpush1.bf16.msra.mxu0 0
    %240 = vmatprep.subr.bf16.mxu0 0
    %241 = vmatpush1.bf16.msra.mxu0 0
    %242 = vmatprep.mubr.bf16.mxu0 0
    %243 = vmatmul.mubr.bf16.gmra.mrb[0].mxu0 %v157
    %v244 = vpop.f32.mrb[0].mxu0
    %v245 = vadd.f32 %v161, %v244
    %v246 = vpop.f32.mrb[0].mxu0
    %v247 = vpop.f32.mrb[0].mxu0
    %v248 = vpop.f32.mrb[0].mxu0
    %249 = vdwg.mxu0
    %v250 = vmax.f32 %v245, 0.0
    %251 = vadd.xlane.f32.xlu0 %v250
    %v252 = vpop.xlane.xlu0 %251
    %v253 = vmul.f32 %v250, %v250
    %254 = vadd.xlane.f32.xlu0 %v253
    %v255 = vpop.xlane.xlu0 %254
    %v256 = vmul.f32 %v252, 0.03125
    %v257 = vmul.f32 %v255, 0.03125
    %v258 = vmul.f32 %v256, %v256
    %v259 = vsub.f32 %v257, %v258
    %v260 = vsub.f32 %v250, %v256
    %v261 = vadd.f32 %v259, 1e-05
    %v262 = vrsqrt.pop %v261
    %v263 = vmul.f32 %v260, %v262
    %v264 = vlaneseq
    %v265 = vshrl.u32 %v264, 7
    %v266 = vsub.s32 1, %v265
    %v267 = vrot.slane %v156, %v266
    %v268 = vmul.f32 %v263, %v267
    %v269 = vlaneseq
    %v270 = vshrl.u32 %v269, 7
    %v271 = vsub.s32 2, %v270
    %v272 = vrot.slane %v156, %v271
    %v273 = vadd.f32 %v268, %v272
    %s274 = scalar_lea.vmem [#allocation5], 128
    %v275 = vld [vmem:[%s274] sm:$0xf]
    %v276 = vld [vmem:[%s274 + $0x4] sm:$0xf]
    %v277 = vld [vmem:[%s274 + $0x8] sm:$0xf]
    %v278 = vld [vmem:[%s274 + $0xc] sm:$0xf]
    %v279 = vld [vmem:[%s274 + $0x10] sm:$0xf]
    %v280 = vld [vmem:[%s274 + $0x14] sm:$0xf]
    %v281 = vld [vmem:[%s274 + $0x18] sm:$0xf]
    %v282 = vld [vmem:[%s274 + $0x1c] sm:$0xf]
    %v283 = vld [vmem:[%s274 + $0x20] sm:$0xf]
    %v284 = vld [vmem:[%s274 + $0x24] sm:$0xf]
    %v285 = vld [vmem:[%s274 + $0x28] sm:$0xf]
    %v286 = vld [vmem:[%s274 + $0x2c] sm:$0xf]
    %v287 = vld [vmem:[%s274 + $0x30] sm:$0xf]
    %v288 = vld [vmem:[%s274 + $0x34] sm:$0xf]
    %v289 = vld [vmem:[%s274 + $0x38] sm:$0xf]
    %v290 = vld [vmem:[%s274 + $0x3c] sm:$0xf]
    %s291 = scalar_lea.vmem [#allocation7], 16
    %v292 = vld [vmem:[%s291] sm:$0xff]
    %v293 = vpack.c.bf16 %v273, %v273
    %v294 = vlaneseq
    %v295 = vshrl.u32 %v294, 7
    %v296 = vsub.s32 0, %v295
    %v297 = vrot.slane %v292, %v296
    %v314 = vunpack.c.l.b16 %v275
    %v315 = vunpack.c.l.b16 %v276
    %v316 = vunpack.c.l.b16 %v277
    %v317 = vunpack.c.l.b16 %v278
    %v318 = vunpack.c.l.b16 %v279
    %v319 = vunpack.c.l.b16 %v280
    %v320 = vunpack.c.l.b16 %v281
    %v321 = vunpack.c.l.b16 %v282
    %v322 = vunpack.c.l.b16 %v283
    %v323 = vunpack.c.l.b16 %v284
    %v324 = vunpack.c.l.b16 %v285
    %v325 = vunpack.c.l.b16 %v286
    %v326 = vunpack.c.l.b16 %v287
    %v327 = vunpack.c.l.b16 %v288
    %v328 = vunpack.c.l.b16 %v289
    %v329 = vunpack.c.l.b16 %v290
    %v330 = vpack.c.b16 %v315, %v314
    %v331 = vpack.c.b16 %v317, %v316
    %v332 = vpack.c.b16 %v319, %v318
    %v333 = vpack.c.b16 %v321, %v320
    %v334 = vpack.c.b16 %v323, %v322
    %v335 = vpack.c.b16 %v325, %v324
    %v336 = vpack.c.b16 %v327, %v326
    %v337 = vpack.c.b16 %v329, %v328
    %346 = vmatprep.subr.bf16.mxu0 0
    %347 = vmatpush1.bf16.msra.mxu0 %v330
    %348 = vmatprep.subr.bf16.mxu0 0
    %349 = vmatpush1.bf16.msra.mxu0 %v331
    %350 = vmatprep.subr.bf16.mxu0 0
    %351 = vmatpush1.bf16.msra.mxu0 %v332
    %352 = vmatprep.subr.bf16.mxu0 0
    %353 = vmatpush1.bf16.msra.mxu0 %v333
    %354 = vmatprep.subr.bf16.mxu0 0
    %355 = vmatpush1.bf16.msra.mxu0 %v334
    %356 = vmatprep.subr.bf16.mxu0 0
    %357 = vmatpush1.bf16.msra.mxu0 %v335
    %358 = vmatprep.subr.bf16.mxu0 0
    %359 = vmatpush1.bf16.msra.mxu0 %v336
    %360 = vmatprep.subr.bf16.mxu0 0
    %361 = vmatpush1.bf16.msra.mxu0 %v337
    %362 = vmatprep.subr.bf16.mxu0 0
    %363 = vmatpush1.bf16.msra.mxu0 0
    %364 = vmatprep.subr.bf16.mxu0 0
    %365 = vmatpush1.bf16.msra.mxu0 0
    %366 = vmatprep.subr.bf16.mxu0 0
    %367 = vmatpush1.bf16.msra.mxu0 0
    %368 = vmatprep.subr.bf16.mxu0 0
    %369 = vmatpush1.bf16.msra.mxu0 0
    %370 = vmatprep.subr.bf16.mxu0 0
    %371 = vmatpush1.bf16.msra.mxu0 0
    %372 = vmatprep.subr.bf16.mxu0 0
    %373 = vmatpush1.bf16.msra.mxu0 0
    %374 = vmatprep.subr.bf16.mxu0 0
    %375 = vmatpush1.bf16.msra.mxu0 0
    %376 = vmatprep.subr.bf16.mxu0 0
    %377 = vmatpush1.bf16.msra.mxu0 0
    %378 = vmatprep.mubr.bf16.mxu0 0
    %379 = vmatmul.mubr.bf16.gmra.mrb[0].mxu0 %v293
    %v380 = vpop.f32.mrb[0].mxu0
    %v381 = vadd.f32 %v297, %v380
    %v382 = vpop.f32.mrb[0].mxu0
    %v383 = vpop.f32.mrb[0].mxu0
    %v384 = vpop.f32.mrb[0].mxu0
    %385 = vdwg.mxu0
    %v386 = vxor.u32 %v381, 2147483648
    %v387 = vmul.f32 %v386, 1.442695
    %v388 = vpow.pop %v387
    %v389 = vadd.f32 %v388, 1.0
    %v390 = vrcp.pop %v389
    %v391 = vmul.f32 1.0, %v390
    %vm392 = vcmask 64512
    %393 = vst.msk [vmem:[#allocation8] sm:$0xff] %vm392, %v391
    // Predicated region
    $region26: #{base_mlp_forward.1} parent=1 // pred_check
      _
    $region27: #{base_mlp_forward.1} parent=1 // pred_check_branch
      %395 = sbr.rel (0) target = $region29
    $region28: #{base_mlp_forward.1} parent=1 // pred_region
      %s397 = ssub.s32 128, 128
      %398 = vsyncadd [#allocation4], %s397
      %s400 = sshll.u32 [#allocation8], 4
      %s401 = int_to_ptr.vmem [resolvable:$true] %s400
      %403 = dma.vmem_to_hbm [thread:$0]  %s401, 128, %s3, [#allocation4]
    $region29: #{base_mlp_forward.1} parent=1 // pred_fallthru
      _
    // Predicated region
    $region30: #{base_mlp_forward.1} parent=1 // pred_check
      _
    $region31: #{base_mlp_forward.1} parent=1 // pred_check_branch
      %405 = sbr.rel (0) target = $region33
    $region32: #{base_mlp_forward.1} parent=1 // pred_region
      %406 = dma.done [#allocation4], 128
    $region33: #{base_mlp_forward.1} parent=1 // pred_fallthru
      _
    %407 = vsyncpa [#allocation3], 1
    %408 = vsyncpa [#allocation6], 1
    %409 = vsyncpa [#allocation4], 1

</llo_original>
